<compile_context>
chip_gen: v6e
topology: v6e:2x2x1
jax: 0.10.0
libtpu: 0.0.40
codegen_flags: <defaults>
</compile_context>

<pallas_src>
import functools

import jax
import jax.numpy as jnp
from jax.experimental import pallas as pl
from jax.experimental.pallas import tpu as pltpu


def _round_up(x, m):
    return ((x + m - 1) // m) * m


def _cdiv(a, b):
    return (a + b - 1) // b


def _default_epilogue_dtype():
    """bf16 bias+ReLU epilogue on chips with a bf16 VPU (v6e/v7x); f32 on
    older chips (v5e and earlier have no bf16 VPU path)."""
    try:
        kind = jax.devices()[0].device_kind.lower()
    except Exception:
        return jnp.float32
    for old in ("v2", "v3", "v4", "v5"):
        if old in kind:
            return jnp.float32
    return jnp.bfloat16


def _mlp_kernel(*refs, num_layers, epilogue_dtype):
    # refs = (x, w0, b0, w1, b1, ..., w{L-1}, b{L-1}, o)
    x_ref = refs[0]
    o_ref = refs[-1]

    h = x_ref[...]                                   # (TB, in_pad), bf16
    for l in range(num_layers):
        w_ref = refs[1 + 2 * l]                      # (in_pad, out_pad) bf16, resident
        b_ref = refs[2 + 2 * l]                      # (1, out_pad) f32, resident
        # MXU matmul, f32 accumulation.
        y = jnp.dot(h, w_ref[...], preferred_element_type=jnp.float32)
        if l < num_layers - 1:
            if epilogue_dtype == jnp.bfloat16:
                # bf16 VPU epilogue (v6e/v7x): halves VALU pressure on narrow layers.
                yb = y.astype(jnp.bfloat16) + b_ref[...].astype(jnp.bfloat16)
                h = jnp.maximum(yb, 0.0)
            else:
                # f32 epilogue (v5e has no bf16 VPU path).
                h = jnp.maximum(y + b_ref[...], 0.0).astype(jnp.bfloat16)
        else:
            o_ref[...] = (y + b_ref[...]).astype(o_ref.dtype)
    # TODO(synk): for very deep/wide MLPs stage `h` through one reused VMEM
    # scratch sized to the widest layer if the unrolled loop inflates live ranges.


def init_mlp_params(key, input_dim, hidden_dim, output_dim, num_layers):
    """Deterministic init mirroring nn.Linear default (uniform(+-1/sqrt(in)));
    weight stored in PyTorch layout (out, in), f32."""
    h = [hidden_dim] * (num_layers - 1)
    params = []
    for n, k in zip([input_dim] + h, h + [output_dim]):
        key, kw, kb = jax.random.split(key, 3)
        bound = 1.0 / float(n) ** 0.5
        w = jax.random.uniform(kw, (k, n), jnp.float32, -bound, bound)
        b = jax.random.uniform(kb, (k,), jnp.float32, -bound, bound)
        params.append((w, b))
    return params


def prepare_mlp_params(params, *, weight_dtype=jnp.bfloat16):
    """One-time prep: transpose to (in, out), pad feature dims to multiples of
    128 (lane-dense / MXU-friendly; also the v5e MXU granule), cast weights to
    bf16.  Biases stay f32 (cast to bf16 in-kernel only where profitable)."""
    layers = []
    for w, b in params:
        out_d, in_d = w.shape
        in_p = _round_up(in_d, 128)
        out_p = _round_up(out_d, 128)
        w_pad = jnp.zeros((in_p, out_p), weight_dtype)
        w_pad = w_pad.at[:in_d, :out_d].set(w.T.astype(weight_dtype))
        b_pad = jnp.zeros((1, out_p), jnp.float32)
        b_pad = b_pad.at[0, :out_d].set(b)
        layers.append((w_pad, b_pad))
    return {
        "layers": layers,
        "input_dim": int(params[0][0].shape[1]),
        "output_dim": int(params[-1][0].shape[0]),
    }


def mlp_forward(x, prepared, *, max_batch_tile=512, out_dtype=jnp.bfloat16,
                epilogue_dtype=None):
    """Fused MLP forward. Matches MLP.forward: ReLU on all but the last layer.
    Accepts arbitrary leading dims (like nn.Linear); last dim = input_dim."""
    layers = prepared["layers"]
    input_dim = prepared["input_dim"]
    output_dim = prepared["output_dim"]
    num_layers = len(layers)
    in_pad = layers[0][0].shape[0]
    out_pad = layers[-1][0].shape[1]
    max_pad = max(int(w.shape[1]) for w, _ in layers)

    if x.shape[-1] != input_dim:
        raise ValueError(
            f"x.shape[-1]={x.shape[-1]} does not match MLP input_dim={input_dim}")

    if epilogue_dtype is None:
        epilogue_dtype = _default_epilogue_dtype()

    lead_shape = x.shape[:-1]
    x2 = x.reshape(-1, input_dim)
    B = x2.shape[0]

    # Pad batch rows only to the bf16 sublane granule (<= 15 extra rows);
    # any remaining raggedness of the last batch tile is handled by Pallas
    # block padding (OOB output rows are simply not written).
    B16 = _round_up(max(B, 1), 16)
    TB = _round_up(min(max_batch_tile, B16), 16)
    # v7x megacore: ensure the "parallel" batch axis has >= 2 steps when there
    # is enough work so both TensorCores get a share (no-op on v5e/v6e).
    if B16 >= 32 and _cdiv(B16, TB) < 2:
        TB = _round_up(_cdiv(B16, 2), 16)
    grid = (_cdiv(B16, TB),)

    # Cheap padding (no zeros + dynamic-update-slice full pass).
    x_p = x2.astype(jnp.bfloat16)
    pad_rows = B16 - B
    pad_cols = in_pad - input_dim
    if pad_rows or pad_cols:
        x_p = jnp.pad(x_p, ((0, pad_rows), (0, pad_cols)))

    args = [x_p]
    for w, b in layers:
        args.extend([w, b])

    out_itemsize = jnp.dtype(out_dtype).itemsize
    weight_bytes = sum(w.size * w.dtype.itemsize + b.size * b.dtype.itemsize
                       for w, b in layers)
    io_bytes = 2 * TB * in_pad * 2 + 2 * TB * out_pad * out_itemsize
    tmp_bytes = 2 * TB * max_pad * 4  # a couple of f32 layer temporaries

    flops = 2 * B16 * sum(int(w.shape[0]) * int(w.shape[1]) for w, _ in layers)
    cost = pl.CostEstimate(
        flops=flops, transcendentals=0,
        bytes_accessed=int(x_p.size * 2 + weight_bytes
                           + B16 * out_pad * out_itemsize))

    def _build_specs(single_buffer_weights):
        specs = [pl.BlockSpec((TB, in_pad), lambda i: (i, 0))]
        for w, b in layers:
            if single_buffer_weights:
                # Constant index_map -> resident; single buffer saves weight VMEM.
                specs.append(pl.BlockSpec(w.shape, lambda i: (0, 0),
                                          pipeline_mode=pl.Buffered(1)))
                specs.append(pl.BlockSpec(b.shape, lambda i: (0, 0),
                                          pipeline_mode=pl.Buffered(1)))
            else:
                specs.append(pl.BlockSpec(w.shape, lambda i: (0, 0)))
                specs.append(pl.BlockSpec(b.shape, lambda i: (0, 0)))
        return specs

    def _run(single_buffer_weights):
        wfactor = 1 if single_buffer_weights else 2
        vmem_limit = int(1.25 * (wfactor * weight_bytes + io_bytes + tmp_bytes))
        vmem_limit = min(max(vmem_limit, 4 << 20), 127 << 20)
        return pl.pallas_call(
            functools.partial(_mlp_kernel, num_layers=num_layers,
                              epilogue_dtype=epilogue_dtype),
            out_shape=jax.ShapeDtypeStruct((B16, out_pad), out_dtype),
            grid=grid,
            in_specs=_build_specs(single_buffer_weights),
            out_specs=pl.BlockSpec((TB, out_pad), lambda i: (i, 0)),
            compiler_params=pltpu.CompilerParams(
                dimension_semantics=("parallel",),   # megacore sharding on v7x
                vmem_limit_bytes=vmem_limit),
            cost_estimate=cost,
        )(*args)

    try:
        out = _run(True)    # single-buffered resident weights (preferred)
    except Exception:
        out = _run(False)   # fallback: default (double-buffered) weight blocks

    out = out[:B, :output_dim]
    return out.reshape(lead_shape + (output_dim,))


def mlp_reference(x, params):
    num_layers = len(params)
    for i, (w, b) in enumerate(params):
        x = x @ w.T + b
        if i < num_layers - 1:
            x = jnp.maximum(x, 0.0)
    return x


if __name__ == "__main__":
    key = jax.random.PRNGKey(0)
    k_x, k_p = jax.random.split(key)

    batch = 8
    input_dim, hidden_dim, output_dim, num_layers = 16, 32, 8, 3

    x = jax.random.normal(k_x, (batch, input_dim), jnp.float32)
    params = init_mlp_params(k_p, input_dim, hidden_dim, output_dim, num_layers)
    prepared = prepare_mlp_params(params)   # done once, outside the forward pass

    out = mlp_forward(x, prepared)
    out = jax.block_until_ready(out)

    ref = mlp_reference(x, params)          # f32 reference
    assert out.shape == (batch, output_dim)
    # bf16 MXU operands / bf16 output -> compare at bf16-level tolerance.
    assert jnp.allclose(out.astype(jnp.float32), ref, atol=5e-2, rtol=5e-2)

    print("KERNEL_OK")
</pallas_src>

<mosaic_0001>
module attributes {stable_mosaic.version = 11 : i64} {
  func.func @_mlp_kernel(%arg0: i32, %arg1: memref<16x128xbf16, #tpu.memory_space<vmem>>, %arg2: memref<128x128xbf16, #tpu.memory_space<vmem>>, %arg3: memref<1x128xf32, #tpu.memory_space<vmem>>, %arg4: memref<128x128xbf16, #tpu.memory_space<vmem>>, %arg5: memref<1x128xf32, #tpu.memory_space<vmem>>, %arg6: memref<128x128xbf16, #tpu.memory_space<vmem>>, %arg7: memref<1x128xf32, #tpu.memory_space<vmem>>, %arg8: memref<16x128xbf16, #tpu.memory_space<vmem>>) attributes {dimension_semantics = [#tpu.dimension_semantics<parallel>], iteration_bounds = array<i64: 1>, scalar_prefetch = 0 : i64, scratch_operands = 0 : i64, tpu.core_type = #tpu.core_type<tc>, window_params = [{transform_indices = @transform_0, window_bounds = array<i64: 16, 128>}, {pipeline_mode = #tpu.pipeline_mode<synchronous>, transform_indices = @transform_1, window_bounds = array<i64: 128, 128>}, {pipeline_mode = #tpu.pipeline_mode<synchronous>, transform_indices = @transform_2, window_bounds = array<i64: 1, 128>}, {pipeline_mode = #tpu.pipeline_mode<synchronous>, transform_indices = @transform_3, window_bounds = array<i64: 128, 128>}, {pipeline_mode = #tpu.pipeline_mode<synchronous>, transform_indices = @transform_4, window_bounds = array<i64: 1, 128>}, {pipeline_mode = #tpu.pipeline_mode<synchronous>, transform_indices = @transform_5, window_bounds = array<i64: 128, 128>}, {pipeline_mode = #tpu.pipeline_mode<synchronous>, transform_indices = @transform_6, window_bounds = array<i64: 1, 128>}, {transform_indices = @transform_7, window_bounds = array<i64: 16, 128>}]} {
    %c0 = arith.constant 0 : index
    %c0_0 = arith.constant 0 : index
    %0 = vector.load %arg1[%c0, %c0_0] : memref<16x128xbf16, #tpu.memory_space<vmem>>, vector<16x128xbf16>
    %c0_1 = arith.constant 0 : index
    %c0_2 = arith.constant 0 : index
    %1 = vector.load %arg2[%c0_1, %c0_2] : memref<128x128xbf16, #tpu.memory_space<vmem>>, vector<128x128xbf16>
    %cst = arith.constant dense<0.000000e+00> : vector<16x128xf32>
    %2 = tpu.matmul %0, %1, %cst {dimension_numbers = #tpu.dot_dimension_numbers<[1], [0], [0], [1], [0, 0, 1, 1], [], []>} : vector<16x128xbf16>, vector<128x128xbf16>, vector<16x128xf32> -> vector<16x128xf32>
    %3 = arith.truncf %2 : vector<16x128xf32> to vector<16x128xbf16>
    %c0_3 = arith.constant 0 : index
    %c0_4 = arith.constant 0 : index
    %4 = vector.load %arg3[%c0_3, %c0_4] : memref<1x128xf32, #tpu.memory_space<vmem>>, vector<1x128xf32>
    %5 = arith.truncf %4 : vector<1x128xf32> to vector<1x128xbf16>
    %6 = vector.broadcast %5 : vector<1x128xbf16> to vector<16x128xbf16>
    %7 = arith.addf %3, %6 : vector<16x128xbf16>
    %cst_5 = arith.constant 0.000000e+00 : bf16
    %8 = vector.broadcast %cst_5 : bf16 to vector<16x128xbf16>
    %9 = arith.maximumf %7, %8 : vector<16x128xbf16>
    %c0_6 = arith.constant 0 : index
    %c0_7 = arith.constant 0 : index
    %10 = vector.load %arg4[%c0_6, %c0_7] : memref<128x128xbf16, #tpu.memory_space<vmem>>, vector<128x128xbf16>
    %cst_8 = arith.constant dense<0.000000e+00> : vector<16x128xf32>
    %11 = tpu.matmul %9, %10, %cst_8 {dimension_numbers = #tpu.dot_dimension_numbers<[1], [0], [0], [1], [0, 0, 1, 1], [], []>} : vector<16x128xbf16>, vector<128x128xbf16>, vector<16x128xf32> -> vector<16x128xf32>
    %12 = arith.truncf %11 : vector<16x128xf32> to vector<16x128xbf16>
    %c0_9 = arith.constant 0 : index
    %c0_10 = arith.constant 0 : index
    %13 = vector.load %arg5[%c0_9, %c0_10] : memref<1x128xf32, #tpu.memory_space<vmem>>, vector<1x128xf32>
    %14 = arith.truncf %13 : vector<1x128xf32> to vector<1x128xbf16>
    %15 = vector.broadcast %14 : vector<1x128xbf16> to vector<16x128xbf16>
    %16 = arith.addf %12, %15 : vector<16x128xbf16>
    %cst_11 = arith.constant 0.000000e+00 : bf16
    %17 = vector.broadcast %cst_11 : bf16 to vector<16x128xbf16>
    %18 = arith.maximumf %16, %17 : vector<16x128xbf16>
    %c0_12 = arith.constant 0 : index
    %c0_13 = arith.constant 0 : index
    %19 = vector.load %arg6[%c0_12, %c0_13] : memref<128x128xbf16, #tpu.memory_space<vmem>>, vector<128x128xbf16>
    %cst_14 = arith.constant dense<0.000000e+00> : vector<16x128xf32>
    %20 = tpu.matmul %18, %19, %cst_14 {dimension_numbers = #tpu.dot_dimension_numbers<[1], [0], [0], [1], [0, 0, 1, 1], [], []>} : vector<16x128xbf16>, vector<128x128xbf16>, vector<16x128xf32> -> vector<16x128xf32>
    %c0_15 = arith.constant 0 : index
    %c0_16 = arith.constant 0 : index
    %21 = vector.load %arg7[%c0_15, %c0_16] : memref<1x128xf32, #tpu.memory_space<vmem>>, vector<1x128xf32>
    %22 = vector.broadcast %21 : vector<1x128xf32> to vector<16x128xf32>
    %23 = arith.addf %20, %22 : vector<16x128xf32>
    %24 = arith.truncf %23 : vector<16x128xf32> to vector<16x128xbf16>
    %c0_17 = arith.constant 0 : index
    %c0_18 = arith.constant 0 : index
    %25 = vector.load %arg8[%c0_17, %c0_18] : memref<16x128xbf16, #tpu.memory_space<vmem>>, vector<16x128xbf16>
    tpu.vector_store %arg8[%c0_17, %c0_18], %24 {strides = array<i32>} : memref<16x128xbf16, #tpu.memory_space<vmem>>, vector<16x128xbf16>,
    return
  }
  func.func @transform_0(%arg0: i32) -> (i32, i32) {
    %c0_i32 = arith.constant 0 : i32
    %c0_i32_0 = arith.constant 0 : i32
    return %arg0, %c0_i32 : i32, i32
  }
  func.func @transform_1(%arg0: i32) -> (i32, i32) {
    %c0_i32 = arith.constant 0 : i32
    %c0_i32_0 = arith.constant 0 : i32
    %c0_i32_1 = arith.constant 0 : i32
    return %c0_i32, %c0_i32_0 : i32, i32
  }
  func.func @transform_2(%arg0: i32) -> (i32, i32) {
    %c0_i32 = arith.constant 0 : i32
    %c0_i32_0 = arith.constant 0 : i32
    %c0_i32_1 = arith.constant 0 : i32
    return %c0_i32, %c0_i32_0 : i32, i32
  }
  func.func @transform_3(%arg0: i32) -> (i32, i32) {
    %c0_i32 = arith.constant 0 : i32
    %c0_i32_0 = arith.constant 0 : i32
    %c0_i32_1 = arith.constant 0 : i32
    return %c0_i32, %c0_i32_0 : i32, i32
  }
  func.func @transform_4(%arg0: i32) -> (i32, i32) {
    %c0_i32 = arith.constant 0 : i32
    %c0_i32_0 = arith.constant 0 : i32
    %c0_i32_1 = arith.constant 0 : i32
    return %c0_i32, %c0_i32_0 : i32, i32
  }
  func.func @transform_5(%arg0: i32) -> (i32, i32) {
    %c0_i32 = arith.constant 0 : i32
    %c0_i32_0 = arith.constant 0 : i32
    %c0_i32_1 = arith.constant 0 : i32
    return %c0_i32, %c0_i32_0 : i32, i32
  }
  func.func @transform_6(%arg0: i32) -> (i32, i32) {
    %c0_i32 = arith.constant 0 : i32
    %c0_i32_0 = arith.constant 0 : i32
    %c0_i32_1 = arith.constant 0 : i32
    return %c0_i32, %c0_i32_0 : i32, i32
  }
  func.func @transform_7(%arg0: i32) -> (i32, i32) {
    %c0_i32 = arith.constant 0 : i32
    %c0_i32_0 = arith.constant 0 : i32
    return %arg0, %c0_i32 : i32, i32
  }
}

module attributes {stable_mosaic.version = 11 : i64} {
  func.func @_mlp_kernel(%arg0: i32, %arg1: memref<16x128xbf16, #tpu.memory_space<vmem>>, %arg2: memref<128x128xbf16, #tpu.memory_space<vmem>>, %arg3: memref<1x128xf32, #tpu.memory_space<vmem>>, %arg4: memref<128x128xbf16, #tpu.memory_space<vmem>>, %arg5: memref<1x128xf32, #tpu.memory_space<vmem>>, %arg6: memref<128x128xbf16, #tpu.memory_space<vmem>>, %arg7: memref<1x128xf32, #tpu.memory_space<vmem>>, %arg8: memref<16x128xbf16, #tpu.memory_space<vmem>>) attributes {dimension_semantics = [#tpu.dimension_semantics<parallel>], iteration_bounds = array<i64: 1>, scalar_prefetch = 0 : i64, scratch_operands = 0 : i64, tpu.core_type = #tpu.core_type<tc>, window_params = [{transform_indices = @transform_0, window_bounds = array<i64: 16, 128>}, {pipeline_mode = #tpu.pipeline_mode<synchronous>, transform_indices = @transform_1, window_bounds = array<i64: 128, 128>}, {pipeline_mode = #tpu.pipeline_mode<synchronous>, transform_indices = @transform_2, window_bounds = array<i64: 1, 128>}, {pipeline_mode = #tpu.pipeline_mode<synchronous>, transform_indices = @transform_3, window_bounds = array<i64: 128, 128>}, {pipeline_mode = #tpu.pipeline_mode<synchronous>, transform_indices = @transform_4, window_bounds = array<i64: 1, 128>}, {pipeline_mode = #tpu.pipeline_mode<synchronous>, transform_indices = @transform_5, window_bounds = array<i64: 128, 128>}, {pipeline_mode = #tpu.pipeline_mode<synchronous>, transform_indices = @transform_6, window_bounds = array<i64: 1, 128>}, {transform_indices = @transform_7, window_bounds = array<i64: 16, 128>}]} {
    %c0 = arith.constant 0 : index
    %c0_0 = arith.constant 0 : index
    %0 = vector.load %arg1[%c0, %c0_0] : memref<16x128xbf16, #tpu.memory_space<vmem>>, vector<16x128xbf16>
    %c0_1 = arith.constant 0 : index
    %c0_2 = arith.constant 0 : index
    %1 = vector.load %arg2[%c0_1, %c0_2] : memref<128x128xbf16, #tpu.memory_space<vmem>>, vector<128x128xbf16>
    %cst = arith.constant dense<0.000000e+00> : vector<16x128xf32>
    %2 = tpu.matmul %0, %1, %cst {dimension_numbers = #tpu.dot_dimension_numbers<[1], [0], [0], [1], [0, 0, 1, 1], [], []>} : vector<16x128xbf16>, vector<128x128xbf16>, vector<16x128xf32> -> vector<16x128xf32>
    %3 = arith.truncf %2 : vector<16x128xf32> to vector<16x128xbf16>
    %c0_3 = arith.constant 0 : index
    %c0_4 = arith.constant 0 : index
    %4 = vector.load %arg3[%c0_3, %c0_4] : memref<1x128xf32, #tpu.memory_space<vmem>>, vector<1x128xf32>
    %5 = arith.truncf %4 : vector<1x128xf32> to vector<1x128xbf16>
    %6 = vector.broadcast %5 : vector<1x128xbf16> to vector<16x128xbf16>
    %7 = arith.addf %3, %6 : vector<16x128xbf16>
    %cst_5 = arith.constant 0.000000e+00 : bf16
    %8 = vector.broadcast %cst_5 : bf16 to vector<16x128xbf16>
    %9 = arith.maximumf %7, %8 : vector<16x128xbf16>
    %c0_6 = arith.constant 0 : index
    %c0_7 = arith.constant 0 : index
    %10 = vector.load %arg4[%c0_6, %c0_7] : memref<128x128xbf16, #tpu.memory_space<vmem>>, vector<128x128xbf16>
    %cst_8 = arith.constant dense<0.000000e+00> : vector<16x128xf32>
    %11 = tpu.matmul %9, %10, %cst_8 {dimension_numbers = #tpu.dot_dimension_numbers<[1], [0], [0], [1], [0, 0, 1, 1], [], []>} : vector<16x128xbf16>, vector<128x128xbf16>, vector<16x128xf32> -> vector<16x128xf32>
    %12 = arith.truncf %11 : vector<16x128xf32> to vector<16x128xbf16>
    %c0_9 = arith.constant 0 : index
    %c0_10 = arith.constant 0 : index
    %13 = vector.load %arg5[%c0_9, %c0_10] : memref<1x128xf32, #tpu.memory_space<vmem>>, vector<1x128xf32>
    %14 = arith.truncf %13 : vector<1x128xf32> to vector<1x128xbf16>
    %15 = vector.broadcast %14 : vector<1x128xbf16> to vector<16x128xbf16>
    %16 = arith.addf %12, %15 : vector<16x128xbf16>
    %cst_11 = arith.constant 0.000000e+00 : bf16
    %17 = vector.broadcast %cst_11 : bf16 to vector<16x128xbf16>
    %18 = arith.maximumf %16, %17 : vector<16x128xbf16>
    %c0_12 = arith.constant 0 : index
    %c0_13 = arith.constant 0 : index
    %19 = vector.load %arg6[%c0_12, %c0_13] : memref<128x128xbf16, #tpu.memory_space<vmem>>, vector<128x128xbf16>
    %cst_14 = arith.constant dense<0.000000e+00> : vector<16x128xf32>
    %20 = tpu.matmul %18, %19, %cst_14 {dimension_numbers = #tpu.dot_dimension_numbers<[1], [0], [0], [1], [0, 0, 1, 1], [], []>} : vector<16x128xbf16>, vector<128x128xbf16>, vector<16x128xf32> -> vector<16x128xf32>
    %c0_15 = arith.constant 0 : index
    %c0_16 = arith.constant 0 : index
    %21 = vector.load %arg7[%c0_15, %c0_16] : memref<1x128xf32, #tpu.memory_space<vmem>>, vector<1x128xf32>
    %22 = vector.broadcast %21 : vector<1x128xf32> to vector<16x128xf32>
    %23 = arith.addf %20, %22 : vector<16x128xf32>
    %24 = arith.truncf %23 : vector<16x128xf32> to vector<16x128xbf16>
    %c0_17 = arith.constant 0 : index
    %c0_18 = arith.constant 0 : index
    %25 = vector.load %arg8[%c0_17, %c0_18] : memref<16x128xbf16, #tpu.memory_space<vmem>>, vector<16x128xbf16>
    tpu.vector_store %arg8[%c0_17, %c0_18], %24 {strides = array<i32>} : memref<16x128xbf16, #tpu.memory_space<vmem>>, vector<16x128xbf16>,
    return
  }
  func.func @transform_0(%arg0: i32) -> (i32, i32) {
    %c0_i32 = arith.constant 0 : i32
    %c0_i32_0 = arith.constant 0 : i32
    return %arg0, %c0_i32 : i32, i32
  }
  func.func @transform_1(%arg0: i32) -> (i32, i32) {
    %c0_i32 = arith.constant 0 : i32
    %c0_i32_0 = arith.constant 0 : i32
    %c0_i32_1 = arith.constant 0 : i32
    return %c0_i32, %c0_i32_0 : i32, i32
  }
  func.func @transform_2(%arg0: i32) -> (i32, i32) {
    %c0_i32 = arith.constant 0 : i32
    %c0_i32_0 = arith.constant 0 : i32
    %c0_i32_1 = arith.constant 0 : i32
    return %c0_i32, %c0_i32_0 : i32, i32
  }
  func.func @transform_3(%arg0: i32) -> (i32, i32) {
    %c0_i32 = arith.constant 0 : i32
    %c0_i32_0 = arith.constant 0 : i32
    %c0_i32_1 = arith.constant 0 : i32
    return %c0_i32, %c0_i32_0 : i32, i32
  }
  func.func @transform_4(%arg0: i32) -> (i32, i32) {
    %c0_i32 = arith.constant 0 : i32
    %c0_i32_0 = arith.constant 0 : i32
    %c0_i32_1 = arith.constant 0 : i32
    return %c0_i32, %c0_i32_0 : i32, i32
  }
  func.func @transform_5(%arg0: i32) -> (i32, i32) {
    %c0_i32 = arith.constant 0 : i32
    %c0_i32_0 = arith.constant 0 : i32
    %c0_i32_1 = arith.constant 0 : i32
    return %c0_i32, %c0_i32_0 : i32, i32
  }
  func.func @transform_6(%arg0: i32) -> (i32, i32) {
    %c0_i32 = arith.constant 0 : i32
    %c0_i32_0 = arith.constant 0 : i32
    %c0_i32_1 = arith.constant 0 : i32
    return %c0_i32, %c0_i32_0 : i32, i32
  }
  func.func @transform_7(%arg0: i32) -> (i32, i32) {
    %c0_i32 = arith.constant 0 : i32
    %c0_i32_0 = arith.constant 0 : i32
    return %arg0, %c0_i32 : i32, i32
  }
}

</mosaic_0001>

<llo_original>
// kernel: tpu_custom_call.1
$region0: #{tpu_custom_call.1}
  #allocation0 [shape = 'u32[]', space=smem, size = 0x4, offset = 0x4, fixed_abs, tag = 'smem constant byte address 0x4 - core index']
  #allocation1 [shape = 'u32[144,128]{1,0:T(1,128)}', space=vmem, size = 0x12000, scoped, tag = 'internal scratch']
  %s0 = inlined_call_operand.hbm [shape: bf16[16,128], index: 0, kind: input, shape index: {}]
  %s1 = inlined_call_operand.hbm [shape: bf16[128,128], index: 1, kind: input, shape index: {}]
  %s2 = inlined_call_operand.vmem [shape: f32[1,128], index: 2, kind: input, shape index: {}]
  %s3 = inlined_call_operand.hbm [shape: bf16[128,128], index: 3, kind: input, shape index: {}]
  %s4 = inlined_call_operand.vmem [shape: f32[1,128], index: 4, kind: input, shape index: {}]
  %s5 = inlined_call_operand.hbm [shape: bf16[128,128], index: 5, kind: input, shape index: {}]
  %s6 = inlined_call_operand.vmem [shape: f32[1,128], index: 6, kind: input, shape index: {}]
  %s7 = inlined_call_operand.hbm [shape: bf16[16,128], index: 7, kind: output, shape index: {}]
  %s8 = sld [smem:[#allocation0]]
  $region54: #{tpu_custom_call.1} parent=0
    _
  %s10 = ssub.s32 1, %s8
  %s11 = scalar_select 0, %s10, %s8
  $region1: #{tpu_custom_call.1} parent=0
    #allocation2 [shape = 'u8[4096]{0}', space=vmem, size = 0x1000, scoped, tag = 'input window, operand 0, single buffered']
    #allocation3 [shape = 's32[1]{0}', space=sflag, size = 0x4, scoped, tag = 'scoped memory for tpu_custom_call.1']
    #allocation4 [shape = 's32[1]{0}', space=sflag, size = 0x4, scoped, tag = 'scoped memory for tpu_custom_call.1']
    #allocation5 [shape = 'u8[32768]{0}', space=vmem, size = 0x8000, scoped, tag = 'input window, operand 1, single buffered']
    #allocation6 [shape = 's32[1]{0}', space=sflag, size = 0x4, scoped, tag = 'scoped memory for tpu_custom_call.1']
    #allocation7 [shape = 'u8[32768]{0}', space=vmem, size = 0x8000, scoped, tag = 'input window, operand 3, single buffered']
    #allocation8 [shape = 'u8[32768]{0}', space=vmem, size = 0x8000, scoped, tag = 'input window, operand 5, single buffered']
    #allocation9 [shape = 's32[1]{0}', space=sflag, size = 0x4, scoped, tag = 'scoped memory for tpu_custom_call.1']
    #allocation10 [shape = 'u8[4096]{0}', space=vmem, size = 0x1000, scoped, tag = 'output window, operand 0, single buffered']
    %12 = vsyncpa [#allocation3], 0
    %13 = vsyncpa [#allocation6], 0
    %14 = vsyncpa [#allocation9], 0
    %15 = vsyncpa [#allocation4], 0
    // Predicated region
    $region2: #{tpu_custom_call.1} parent=1 // pred_check
      _
    $region3: #{tpu_custom_call.1} parent=1 // pred_check_branch
      %17 = sbr.rel (0) target = $region5
    $region4: #{tpu_custom_call.1} parent=1 // pred_region
      %s19 = ssub.s32 128, 128
      %20 = vsyncadd [#allocation3], %s19
      %s21 = sshll.u32 [#allocation2], 4
      %s22 = int_to_ptr.vmem [resolvable:$true] %s21
      %27 = dma.hbm_to_vmem [thread:$0]  %s0, 128, %s22, [#allocation3], 64, 64, 4
    $region5: #{tpu_custom_call.1} parent=1 // pred_fallthru
      _
    // Predicated region
    $region6: #{tpu_custom_call.1} parent=1 // pred_check
      _
    $region7: #{tpu_custom_call.1} parent=1 // pred_check_branch
      %29 = sbr.rel (0) target = $region9
    $region8: #{tpu_custom_call.1} parent=1 // pred_region
      %s31 = ssub.s32 1024, 1024
      %32 = vsyncadd [#allocation6], %s31
      %s33 = sshll.u32 [#allocation5], 4
      %s34 = int_to_ptr.vmem [resolvable:$true] %s33
      %39 = dma.hbm_to_vmem [thread:$0]  %s1, 1024, %s34, [#allocation6], 64, 64, 4
    $region9: #{tpu_custom_call.1} parent=1 // pred_fallthru
      _
    // Predicated region
    $region10: #{tpu_custom_call.1} parent=1 // pred_check
      _
    $region11: #{tpu_custom_call.1} parent=1 // pred_check_branch
      %41 = sbr.rel (0) target = $region13
    $region12: #{tpu_custom_call.1} parent=1 // pred_region
      _
    $region13: #{tpu_custom_call.1} parent=1 // pred_fallthru
      _
    // Predicated region
    $region14: #{tpu_custom_call.1} parent=1 // pred_check
      _
    $region15: #{tpu_custom_call.1} parent=1 // pred_check_branch
      %43 = sbr.rel (0) target = $region17
    $region16: #{tpu_custom_call.1} parent=1 // pred_region
      %s45 = ssub.s32 1024, 1024
      %46 = vsyncadd [#allocation6], %s45
      %s47 = sshll.u32 [#allocation7], 4
      %s48 = int_to_ptr.vmem [resolvable:$true] %s47
      %53 = dma.hbm_to_vmem [thread:$0]  %s3, 1024, %s48, [#allocation6], 64, 64, 4
    $region17: #{tpu_custom_call.1} parent=1 // pred_fallthru
      _
    // Predicated region
    $region18: #{tpu_custom_call.1} parent=1 // pred_check
      _
    $region19: #{tpu_custom_call.1} parent=1 // pred_check_branch
      %55 = sbr.rel (0) target = $region21
    $region20: #{tpu_custom_call.1} parent=1 // pred_region
      _
    $region21: #{tpu_custom_call.1} parent=1 // pred_fallthru
      _
    // Predicated region
    $region22: #{tpu_custom_call.1} parent=1 // pred_check
      _
    $region23: #{tpu_custom_call.1} parent=1 // pred_check_branch
      %57 = sbr.rel (0) target = $region25
    $region24: #{tpu_custom_call.1} parent=1 // pred_region
      %s59 = ssub.s32 1024, 1024
      %60 = vsyncadd [#allocation9], %s59
      %s61 = sshll.u32 [#allocation8], 4
      %s62 = int_to_ptr.vmem [resolvable:$true] %s61
      %67 = dma.hbm_to_vmem [thread:$0]  %s5, 1024, %s62, [#allocation9], 64, 64, 4
    $region25: #{tpu_custom_call.1} parent=1 // pred_fallthru
      _
    // Predicated region
    $region26: #{tpu_custom_call.1} parent=1 // pred_check
      _
    $region27: #{tpu_custom_call.1} parent=1 // pred_check_branch
      %69 = sbr.rel (0) target = $region29
    $region28: #{tpu_custom_call.1} parent=1 // pred_region
      _
    $region29: #{tpu_custom_call.1} parent=1 // pred_fallthru
      _
    // Predicated region
    $region30: #{tpu_custom_call.1} parent=1 // pred_check
      _
    $region31: #{tpu_custom_call.1} parent=1 // pred_check_branch
      %71 = sbr.rel (0) target = $region33
    $region32: #{tpu_custom_call.1} parent=1 // pred_region
      %72 = dma.done [#allocation3], 128
    $region33: #{tpu_custom_call.1} parent=1 // pred_fallthru
      _
    // Predicated region
    $region34: #{tpu_custom_call.1} parent=1 // pred_check
      _
    $region35: #{tpu_custom_call.1} parent=1 // pred_check_branch
      %74 = sbr.rel (0) target = $region37
    $region36: #{tpu_custom_call.1} parent=1 // pred_region
      %75 = dma.done [#allocation6], 1024
    $region37: #{tpu_custom_call.1} parent=1 // pred_fallthru
      _
    // Predicated region
    $region38: #{tpu_custom_call.1} parent=1 // pred_check
      _
    $region39: #{tpu_custom_call.1} parent=1 // pred_check_branch
      %77 = sbr.rel (0) target = $region41
    $region40: #{tpu_custom_call.1} parent=1 // pred_region
      %78 = dma.done [#allocation6], 1024
    $region41: #{tpu_custom_call.1} parent=1 // pred_fallthru
      _
    // Predicated region
    $region42: #{tpu_custom_call.1} parent=1 // pred_check
      _
    $region43: #{tpu_custom_call.1} parent=1 // pred_check_branch
      %80 = sbr.rel (0) target = $region45
    $region44: #{tpu_custom_call.1} parent=1 // pred_region
      %81 = dma.done [#allocation9], 1024
    $region45: #{tpu_custom_call.1} parent=1 // pred_fallthru
      _
    %v83 = vld [vmem:[#allocation2] sm:$0xf]
    %v84 = vld [vmem:[#allocation2 + $0x4] sm:$0xf]
    %v85 = vld [vmem:[#allocation5] sm:$0xf]
    %v86 = vld [vmem:[#allocation5 + $0x4] sm:$0xf]
    %v87 = vld [vmem:[#allocation5 + $0x8] sm:$0xf]
    %v88 = vld [vmem:[#allocation5 + $0xc] sm:$0xf]
    %v89 = vld [vmem:[#allocation5 + $0x10] sm:$0xf]
    %v90 = vld [vmem:[#allocation5 + $0x14] sm:$0xf]
    %v91 = vld [vmem:[#allocation5 + $0x18] sm:$0xf]
    %v92 = vld [vmem:[#allocation5 + $0x1c] sm:$0xf]
    %v93 = vld [vmem:[#allocation5 + $0x20] sm:$0xf]
    %v94 = vld [vmem:[#allocation5 + $0x24] sm:$0xf]
    %v95 = vld [vmem:[#allocation5 + $0x28] sm:$0xf]
    %v96 = vld [vmem:[#allocation5 + $0x2c] sm:$0xf]
    %v97 = vld [vmem:[#allocation5 + $0x30] sm:$0xf]
    %v98 = vld [vmem:[#allocation5 + $0x34] sm:$0xf]
    %v99 = vld [vmem:[#allocation5 + $0x38] sm:$0xf]
    %v100 = vld [vmem:[#allocation5 + $0x3c] sm:$0xf]
    %v103 = vunpack.c.l.b16 %v83
    %v104 = vunpack.c.l.b16 %v84
    %v105 = vpack.c.b16 %v104, %v103
    %v123 = vunpack.c.l.b16 %v85
    %v124 = vunpack.c.l.b16 %v86
    %v125 = vunpack.c.l.b16 %v87
    %v126 = vunpack.c.l.b16 %v88
    %v127 = vunpack.c.l.b16 %v89
    %v128 = vunpack.c.l.b16 %v90
    %v129 = vunpack.c.l.b16 %v91
    %v130 = vunpack.c.l.b16 %v92
    %v131 = vunpack.c.l.b16 %v93
    %v132 = vunpack.c.l.b16 %v94
    %v133 = vunpack.c.l.b16 %v95
    %v134 = vunpack.c.l.b16 %v96
    %v135 = vunpack.c.l.b16 %v97
    %v136 = vunpack.c.l.b16 %v98
    %v137 = vunpack.c.l.b16 %v99
    %v138 = vunpack.c.l.b16 %v100
    %v139 = vpack.c.b16 %v124, %v123
    %v140 = vpack.c.b16 %v126, %v125
    %v141 = vpack.c.b16 %v128, %v127
    %v142 = vpack.c.b16 %v130, %v129
    %v143 = vpack.c.b16 %v132, %v131
    %v144 = vpack.c.b16 %v134, %v133
    %v145 = vpack.c.b16 %v136, %v135
    %v146 = vpack.c.b16 %v138, %v137
    %155 = vmatprep.subr.bf16.mxu0 0
    %156 = vmatpush1.bf16.msra.mxu0 %v146
    %157 = vmatprep.subr.bf16.mxu0 0
    %158 = vmatpush1.bf16.msra.mxu0 %v145
    %159 = vmatprep.subr.bf16.mxu0 0
    %160 = vmatpush1.bf16.msra.mxu0 %v144
    %161 = vmatprep.subr.bf16.mxu0 0
    %162 = vmatpush1.bf16.msra.mxu0 %v143
    %163 = vmatprep.subr.bf16.mxu0 0
    %164 = vmatpush1.bf16.msra.mxu0 %v142
    %165 = vmatprep.subr.bf16.mxu0 0
    %166 = vmatpush1.bf16.msra.mxu0 %v141
    %167 = vmatprep.subr.bf16.mxu0 0
    %168 = vmatpush1.bf16.msra.mxu0 %v140
    %169 = vmatprep.subr.bf16.mxu0 0
    %170 = vmatpush1.bf16.msra.mxu0 %v139
    %171 = vmatprep.subr.bf16.mxu0 0
    %172 = vmatpush2.bf16.msra.mxu0 0
    %173 = vmatprep.subr.bf16.mxu0 0
    %174 = vmatpush2.bf16.msra.mxu0 0
    %175 = vmatprep.subr.bf16.mxu0 0
    %176 = vmatpush2.bf16.msra.mxu0 0
    %177 = vmatprep.subr.bf16.mxu0 0
    %178 = vmatpush2.bf16.msra.mxu0 0
    %179 = vmatprep.subr.bf16.mxu0 0
    %180 = vmatpush2.bf16.msra.mxu0 0
    %181 = vmatprep.subr.bf16.mxu0 0
    %182 = vmatpush2.bf16.msra.mxu0 0
    %183 = vmatprep.subr.bf16.mxu0 0
    %184 = vmatpush2.bf16.msra.mxu0 0
    %185 = vmatprep.subr.bf16.mxu0 0
    %186 = vmatpush2.bf16.msra.mxu0 0
    %187 = vmatprep.mubr.bf16.mxu0 0
    %188 = vmatmul.mubr.bf16.gmra.mxu0 %v105
    %v189 = vpop.f32.mrf.mxu0
    %v190 = vadd.f32 0.0, %v189
    %v191 = vpop.f32.mrf.mxu0
    %v192 = vpop.f32.mrf.mxu0
    %v193 = vadd.f32 0.0, %v192
    %v194 = vpop.f32.mrf.mxu0
    %195 = vdwg.mxu0
    %v196 = vpack.c.bf16 %v193, %v190
    %v197 = vld [vmem:[%s2] sm:$0x1]
    %v198 = vpack.c.bf16 %v197, %v197
    %v200 = vpack.i.b16 %v198, %v198
    %v202 = vlaneseq
    %v203 = vshrl.u32 %v202, 7
    %v204 = vsub.s32 0, %v203
    %v205 = vrot.slane %v200, %v204
    %v206 = vadd.bf16 %v196, %v205
    %v207 = vmax.bf16 %v206, 0
    %v208 = vld [vmem:[#allocation7] sm:$0xf]
    %v209 = vld [vmem:[#allocation7 + $0x4] sm:$0xf]
    %v210 = vld [vmem:[#allocation7 + $0x8] sm:$0xf]
    %v211 = vld [vmem:[#allocation7 + $0xc] sm:$0xf]
    %v212 = vld [vmem:[#allocation7 + $0x10] sm:$0xf]
    %v213 = vld [vmem:[#allocation7 + $0x14] sm:$0xf]
    %v214 = vld [vmem:[#allocation7 + $0x18] sm:$0xf]
    %v215 = vld [vmem:[#allocation7 + $0x1c] sm:$0xf]
    %v216 = vld [vmem:[#allocation7 + $0x20] sm:$0xf]
    %v217 = vld [vmem:[#allocation7 + $0x24] sm:$0xf]
    %v218 = vld [vmem:[#allocation7 + $0x28] sm:$0xf]
    %v219 = vld [vmem:[#allocation7 + $0x2c] sm:$0xf]
    %v220 = vld [vmem:[#allocation7 + $0x30] sm:$0xf]
    %v221 = vld [vmem:[#allocation7 + $0x34] sm:$0xf]
    %v222 = vld [vmem:[#allocation7 + $0x38] sm:$0xf]
    %v223 = vld [vmem:[#allocation7 + $0x3c] sm:$0xf]
    %v240 = vunpack.c.l.b16 %v208
    %v241 = vunpack.c.l.b16 %v209
    %v242 = vunpack.c.l.b16 %v210
    %v243 = vunpack.c.l.b16 %v211
    %v244 = vunpack.c.l.b16 %v212
    %v245 = vunpack.c.l.b16 %v213
    %v246 = vunpack.c.l.b16 %v214
    %v247 = vunpack.c.l.b16 %v215
    %v248 = vunpack.c.l.b16 %v216
    %v249 = vunpack.c.l.b16 %v217
    %v250 = vunpack.c.l.b16 %v218
    %v251 = vunpack.c.l.b16 %v219
    %v252 = vunpack.c.l.b16 %v220
    %v253 = vunpack.c.l.b16 %v221
    %v254 = vunpack.c.l.b16 %v222
    %v255 = vunpack.c.l.b16 %v223
    %v256 = vpack.c.b16 %v241, %v240
    %v257 = vpack.c.b16 %v243, %v242
    %v258 = vpack.c.b16 %v245, %v244
    %v259 = vpack.c.b16 %v247, %v246
    %v260 = vpack.c.b16 %v249, %v248
    %v261 = vpack.c.b16 %v251, %v250
    %v262 = vpack.c.b16 %v253, %v252
    %v263 = vpack.c.b16 %v255, %v254
    %272 = vmatprep.subr.bf16.mxu0 0
    %273 = vmatpush1.bf16.msra.mxu0 %v263
    %274 = vmatprep.subr.bf16.mxu0 0
    %275 = vmatpush1.bf16.msra.mxu0 %v262
    %276 = vmatprep.subr.bf16.mxu0 0
    %277 = vmatpush1.bf16.msra.mxu0 %v261
    %278 = vmatprep.subr.bf16.mxu0 0
    %279 = vmatpush1.bf16.msra.mxu0 %v260
    %280 = vmatprep.subr.bf16.mxu0 0
    %281 = vmatpush1.bf16.msra.mxu0 %v259
    %282 = vmatprep.subr.bf16.mxu0 0
    %283 = vmatpush1.bf16.msra.mxu0 %v258
    %284 = vmatprep.subr.bf16.mxu0 0
    %285 = vmatpush1.bf16.msra.mxu0 %v257
    %286 = vmatprep.subr.bf16.mxu0 0
    %287 = vmatpush1.bf16.msra.mxu0 %v256
    %288 = vmatprep.subr.bf16.mxu0 0
    %289 = vmatpush2.bf16.msra.mxu0 0
    %290 = vmatprep.subr.bf16.mxu0 0
    %291 = vmatpush2.bf16.msra.mxu0 0
    %292 = vmatprep.subr.bf16.mxu0 0
    %293 = vmatpush2.bf16.msra.mxu0 0
    %294 = vmatprep.subr.bf16.mxu0 0
    %295 = vmatpush2.bf16.msra.mxu0 0
    %296 = vmatprep.subr.bf16.mxu0 0
    %297 = vmatpush2.bf16.msra.mxu0 0
    %298 = vmatprep.subr.bf16.mxu0 0
    %299 = vmatpush2.bf16.msra.mxu0 0
    %300 = vmatprep.subr.bf16.mxu0 0
    %301 = vmatpush2.bf16.msra.mxu0 0
    %302 = vmatprep.subr.bf16.mxu0 0
    %303 = vmatpush2.bf16.msra.mxu0 0
    %304 = vmatprep.mubr.bf16.mxu0 0
    %305 = vmatmul.mubr.bf16.gmra.mxu0 %v207
    %v306 = vpop.f32.mrf.mxu0
    %v307 = vadd.f32 0.0, %v306
    %v308 = vpop.f32.mrf.mxu0
    %v309 = vpop.f32.mrf.mxu0
    %v310 = vadd.f32 0.0, %v309
    %v311 = vpop.f32.mrf.mxu0
    %312 = vdwg.mxu0
    %v313 = vpack.c.bf16 %v310, %v307
    %v314 = vld [vmem:[%s4] sm:$0x1]
    %v315 = vpack.c.bf16 %v314, %v314
    %v317 = vpack.i.b16 %v315, %v315
    %v319 = vlaneseq
    %v320 = vshrl.u32 %v319, 7
    %v321 = vsub.s32 0, %v320
    %v322 = vrot.slane %v317, %v321
    %v323 = vadd.bf16 %v313, %v322
    %v324 = vmax.bf16 %v323, 0
    %v325 = vld [vmem:[#allocation8] sm:$0xf]
    %v326 = vld [vmem:[#allocation8 + $0x4] sm:$0xf]
    %v327 = vld [vmem:[#allocation8 + $0x8] sm:$0xf]
    %v328 = vld [vmem:[#allocation8 + $0xc] sm:$0xf]
    %v329 = vld [vmem:[#allocation8 + $0x10] sm:$0xf]
    %v330 = vld [vmem:[#allocation8 + $0x14] sm:$0xf]
    %v331 = vld [vmem:[#allocation8 + $0x18] sm:$0xf]
    %v332 = vld [vmem:[#allocation8 + $0x1c] sm:$0xf]
    %v333 = vld [vmem:[#allocation8 + $0x20] sm:$0xf]
    %v334 = vld [vmem:[#allocation8 + $0x24] sm:$0xf]
    %v335 = vld [vmem:[#allocation8 + $0x28] sm:$0xf]
    %v336 = vld [vmem:[#allocation8 + $0x2c] sm:$0xf]
    %v337 = vld [vmem:[#allocation8 + $0x30] sm:$0xf]
    %v338 = vld [vmem:[#allocation8 + $0x34] sm:$0xf]
    %v339 = vld [vmem:[#allocation8 + $0x38] sm:$0xf]
    %v340 = vld [vmem:[#allocation8 + $0x3c] sm:$0xf]
    %v341 = vld [vmem:[%s6] sm:$0x1]
    %v343 = vlaneseq
    %v344 = vshrl.u32 %v343, 7
    %v345 = vsub.s32 0, %v344
    %v346 = vrot.slane %v341, %v345
    %v364 = vunpack.c.l.b16 %v325
    %v365 = vunpack.c.l.b16 %v326
    %v366 = vunpack.c.l.b16 %v327
    %v367 = vunpack.c.l.b16 %v328
    %v368 = vunpack.c.l.b16 %v329
    %v369 = vunpack.c.l.b16 %v330
    %v370 = vunpack.c.l.b16 %v331
    %v371 = vunpack.c.l.b16 %v332
    %v372 = vunpack.c.l.b16 %v333
    %v373 = vunpack.c.l.b16 %v334
    %v374 = vunpack.c.l.b16 %v335
    %v375 = vunpack.c.l.b16 %v336
    %v376 = vunpack.c.l.b16 %v337
    %v377 = vunpack.c.l.b16 %v338
    %v378 = vunpack.c.l.b16 %v339
    %v379 = vunpack.c.l.b16 %v340
    %v380 = vpack.c.b16 %v365, %v364
    %v381 = vpack.c.b16 %v367, %v366
    %v382 = vpack.c.b16 %v369, %v368
    %v383 = vpack.c.b16 %v371, %v370
    %v384 = vpack.c.b16 %v373, %v372
    %v385 = vpack.c.b16 %v375, %v374
    %v386 = vpack.c.b16 %v377, %v376
    %v387 = vpack.c.b16 %v379, %v378
    %396 = vmatprep.subr.bf16.mxu0 0
    %397 = vmatpush1.bf16.msra.mxu0 %v387
    %398 = vmatprep.subr.bf16.mxu0 0
    %399 = vmatpush1.bf16.msra.mxu0 %v386
    %400 = vmatprep.subr.bf16.mxu0 0
    %401 = vmatpush1.bf16.msra.mxu0 %v385
    %402 = vmatprep.subr.bf16.mxu0 0
    %403 = vmatpush1.bf16.msra.mxu0 %v384
    %404 = vmatprep.subr.bf16.mxu0 0
    %405 = vmatpush1.bf16.msra.mxu0 %v383
    %406 = vmatprep.subr.bf16.mxu0 0
    %407 = vmatpush1.bf16.msra.mxu0 %v382
    %408 = vmatprep.subr.bf16.mxu0 0
    %409 = vmatpush1.bf16.msra.mxu0 %v381
    %410 = vmatprep.subr.bf16.mxu0 0
    %411 = vmatpush1.bf16.msra.mxu0 %v380
    %412 = vmatprep.subr.bf16.mxu0 0
    %413 = vmatpush2.bf16.msra.mxu0 0
    %414 = vmatprep.subr.bf16.mxu0 0
    %415 = vmatpush2.bf16.msra.mxu0 0
    %416 = vmatprep.subr.bf16.mxu0 0
    %417 = vmatpush2.bf16.msra.mxu0 0
    %418 = vmatprep.subr.bf16.mxu0 0
    %419 = vmatpush2.bf16.msra.mxu0 0
    %420 = vmatprep.subr.bf16.mxu0 0
    %421 = vmatpush2.bf16.msra.mxu0 0
    %422 = vmatprep.subr.bf16.mxu0 0
    %423 = vmatpush2.bf16.msra.mxu0 0
    %424 = vmatprep.subr.bf16.mxu0 0
    %425 = vmatpush2.bf16.msra.mxu0 0
    %426 = vmatprep.subr.bf16.mxu0 0
    %427 = vmatpush2.bf16.msra.mxu0 0
    %428 = vmatprep.mubr.bf16.mxu0 0
    %429 = vmatmul.mubr.bf16.gmra.mxu0 %v324
    %v430 = vpop.f32.mrf.mxu0
    %v431 = vadd.f32 %v346, %v430
    %v432 = vpop.f32.mrf.mxu0
    %v433 = vpop.f32.mrf.mxu0
    %v434 = vadd.f32 %v346, %v433
    %v435 = vpop.f32.mrf.mxu0
    %436 = vdwg.mxu0
    %v437 = vpack.c.bf16 %v434, %v431
    %v439 = vunpack.c.l.b16 %v437
    %v440 = vunpack.c.h.b16 %v437
    %v441 = vpack.c.b16 %v439, %v439
    %v442 = vpack.c.b16 %v440, %v440
    %445 = vst [vmem:[#allocation10] sm:$0xf] %v441
    %446 = vst [vmem:[#allocation10 + $0x4] sm:$0xf] %v442
    // Predicated region
    $region46: #{tpu_custom_call.1} parent=1 // pred_check
      _
    $region47: #{tpu_custom_call.1} parent=1 // pred_check_branch
      %448 = sbr.rel (0) target = $region49
    $region48: #{tpu_custom_call.1} parent=1 // pred_region
      %s450 = ssub.s32 128, 128
      %451 = vsyncadd [#allocation4], %s450
      %s452 = sshll.u32 [#allocation10], 4
      %s453 = int_to_ptr.vmem [resolvable:$true] %s452
      %458 = dma.vmem_to_hbm [thread:$0]  %s453, 128, %s7, [#allocation4], 64, 64, 4
    $region49: #{tpu_custom_call.1} parent=1 // pred_fallthru
      _
    // Predicated region
    $region50: #{tpu_custom_call.1} parent=1 // pred_check
      _
    $region51: #{tpu_custom_call.1} parent=1 // pred_check_branch
      %460 = sbr.rel (0) target = $region53
    $region52: #{tpu_custom_call.1} parent=1 // pred_region
      %461 = dma.done [#allocation4], 128
    $region53: #{tpu_custom_call.1} parent=1 // pred_fallthru
      _
    %462 = vsyncpa [#allocation3], 1
    %463 = vsyncpa [#allocation6], 1
    %464 = vsyncpa [#allocation9], 1
    %465 = vsyncpa [#allocation4], 1

// kernel: tpu_custom_call.1
$region0: #{tpu_custom_call.1}
  #allocation0 [shape = 'u32[]', space=smem, size = 0x4, offset = 0x4, fixed_abs, tag = 'smem constant byte address 0x4 - core index']
  #allocation1 [shape = 'u32[144,128]{1,0:T(1,128)}', space=vmem, size = 0x12000, scoped, tag = 'internal scratch']
  %s0 = inlined_call_operand.hbm [shape: bf16[16,128], index: 0, kind: input, shape index: {}]
  %s1 = inlined_call_operand.hbm [shape: bf16[128,128], index: 1, kind: input, shape index: {}]
  %s2 = inlined_call_operand.vmem [shape: f32[1,128], index: 2, kind: input, shape index: {}]
  %s3 = inlined_call_operand.hbm [shape: bf16[128,128], index: 3, kind: input, shape index: {}]
  %s4 = inlined_call_operand.vmem [shape: f32[1,128], index: 4, kind: input, shape index: {}]
  %s5 = inlined_call_operand.hbm [shape: bf16[128,128], index: 5, kind: input, shape index: {}]
  %s6 = inlined_call_operand.vmem [shape: f32[1,128], index: 6, kind: input, shape index: {}]
  %s7 = inlined_call_operand.hbm [shape: bf16[16,128], index: 7, kind: output, shape index: {}]
  %s8 = sld [smem:[#allocation0]]
  $region54: #{tpu_custom_call.1} parent=0
    _
  %s10 = ssub.s32 1, %s8
  %s11 = scalar_select 0, %s10, %s8
  $region1: #{tpu_custom_call.1} parent=0
    #allocation2 [shape = 'u8[4096]{0}', space=vmem, size = 0x1000, scoped, tag = 'input window, operand 0, single buffered']
    #allocation3 [shape = 's32[1]{0}', space=sflag, size = 0x4, scoped, tag = 'scoped memory for tpu_custom_call.1']
    #allocation4 [shape = 's32[1]{0}', space=sflag, size = 0x4, scoped, tag = 'scoped memory for tpu_custom_call.1']
    #allocation5 [shape = 'u8[32768]{0}', space=vmem, size = 0x8000, scoped, tag = 'input window, operand 1, single buffered']
    #allocation6 [shape = 's32[1]{0}', space=sflag, size = 0x4, scoped, tag = 'scoped memory for tpu_custom_call.1']
    #allocation7 [shape = 'u8[32768]{0}', space=vmem, size = 0x8000, scoped, tag = 'input window, operand 3, single buffered']
    #allocation8 [shape = 'u8[32768]{0}', space=vmem, size = 0x8000, scoped, tag = 'input window, operand 5, single buffered']
    #allocation9 [shape = 's32[1]{0}', space=sflag, size = 0x4, scoped, tag = 'scoped memory for tpu_custom_call.1']
    #allocation10 [shape = 'u8[4096]{0}', space=vmem, size = 0x1000, scoped, tag = 'output window, operand 0, single buffered']
    %12 = vsyncpa [#allocation3], 0
    %13 = vsyncpa [#allocation6], 0
    %14 = vsyncpa [#allocation9], 0
    %15 = vsyncpa [#allocation4], 0
    // Predicated region
    $region2: #{tpu_custom_call.1} parent=1 // pred_check
      _
    $region3: #{tpu_custom_call.1} parent=1 // pred_check_branch
      %17 = sbr.rel (0) target = $region5
    $region4: #{tpu_custom_call.1} parent=1 // pred_region
      %s19 = ssub.s32 128, 128
      %20 = vsyncadd [#allocation3], %s19
      %s21 = sshll.u32 [#allocation2], 4
      %s22 = int_to_ptr.vmem [resolvable:$true] %s21
      %27 = dma.hbm_to_vmem [thread:$0]  %s0, 128, %s22, [#allocation3], 64, 64, 4
    $region5: #{tpu_custom_call.1} parent=1 // pred_fallthru
      _
    // Predicated region
    $region6: #{tpu_custom_call.1} parent=1 // pred_check
      _
    $region7: #{tpu_custom_call.1} parent=1 // pred_check_branch
      %29 = sbr.rel (0) target = $region9
    $region8: #{tpu_custom_call.1} parent=1 // pred_region
      %s31 = ssub.s32 1024, 1024
      %32 = vsyncadd [#allocation6], %s31
      %s33 = sshll.u32 [#allocation5], 4
      %s34 = int_to_ptr.vmem [resolvable:$true] %s33
      %39 = dma.hbm_to_vmem [thread:$0]  %s1, 1024, %s34, [#allocation6], 64, 64, 4
    $region9: #{tpu_custom_call.1} parent=1 // pred_fallthru
      _
    // Predicated region
    $region10: #{tpu_custom_call.1} parent=1 // pred_check
      _
    $region11: #{tpu_custom_call.1} parent=1 // pred_check_branch
      %41 = sbr.rel (0) target = $region13
    $region12: #{tpu_custom_call.1} parent=1 // pred_region
      _
    $region13: #{tpu_custom_call.1} parent=1 // pred_fallthru
      _
    // Predicated region
    $region14: #{tpu_custom_call.1} parent=1 // pred_check
      _
    $region15: #{tpu_custom_call.1} parent=1 // pred_check_branch
      %43 = sbr.rel (0) target = $region17
    $region16: #{tpu_custom_call.1} parent=1 // pred_region
      %s45 = ssub.s32 1024, 1024
      %46 = vsyncadd [#allocation6], %s45
      %s47 = sshll.u32 [#allocation7], 4
      %s48 = int_to_ptr.vmem [resolvable:$true] %s47
      %53 = dma.hbm_to_vmem [thread:$0]  %s3, 1024, %s48, [#allocation6], 64, 64, 4
    $region17: #{tpu_custom_call.1} parent=1 // pred_fallthru
      _
    // Predicated region
    $region18: #{tpu_custom_call.1} parent=1 // pred_check
      _
    $region19: #{tpu_custom_call.1} parent=1 // pred_check_branch
      %55 = sbr.rel (0) target = $region21
    $region20: #{tpu_custom_call.1} parent=1 // pred_region
      _
    $region21: #{tpu_custom_call.1} parent=1 // pred_fallthru
      _
    // Predicated region
    $region22: #{tpu_custom_call.1} parent=1 // pred_check
      _
    $region23: #{tpu_custom_call.1} parent=1 // pred_check_branch
      %57 = sbr.rel (0) target = $region25
    $region24: #{tpu_custom_call.1} parent=1 // pred_region
      %s59 = ssub.s32 1024, 1024
      %60 = vsyncadd [#allocation9], %s59
      %s61 = sshll.u32 [#allocation8], 4
      %s62 = int_to_ptr.vmem [resolvable:$true] %s61
      %67 = dma.hbm_to_vmem [thread:$0]  %s5, 1024, %s62, [#allocation9], 64, 64, 4
    $region25: #{tpu_custom_call.1} parent=1 // pred_fallthru
      _
    // Predicated region
    $region26: #{tpu_custom_call.1} parent=1 // pred_check
      _
    $region27: #{tpu_custom_call.1} parent=1 // pred_check_branch
      %69 = sbr.rel (0) target = $region29
    $region28: #{tpu_custom_call.1} parent=1 // pred_region
      _
    $region29: #{tpu_custom_call.1} parent=1 // pred_fallthru
      _
    // Predicated region
    $region30: #{tpu_custom_call.1} parent=1 // pred_check
      _
    $region31: #{tpu_custom_call.1} parent=1 // pred_check_branch
      %71 = sbr.rel (0) target = $region33
    $region32: #{tpu_custom_call.1} parent=1 // pred_region
      %72 = dma.done [#allocation3], 128
    $region33: #{tpu_custom_call.1} parent=1 // pred_fallthru
      _
    // Predicated region
    $region34: #{tpu_custom_call.1} parent=1 // pred_check
      _
    $region35: #{tpu_custom_call.1} parent=1 // pred_check_branch
      %74 = sbr.rel (0) target = $region37
    $region36: #{tpu_custom_call.1} parent=1 // pred_region
      %75 = dma.done [#allocation6], 1024
    $region37: #{tpu_custom_call.1} parent=1 // pred_fallthru
      _
    // Predicated region
    $region38: #{tpu_custom_call.1} parent=1 // pred_check
      _
    $region39: #{tpu_custom_call.1} parent=1 // pred_check_branch
      %77 = sbr.rel (0) target = $region41
    $region40: #{tpu_custom_call.1} parent=1 // pred_region
      %78 = dma.done [#allocation6], 1024
    $region41: #{tpu_custom_call.1} parent=1 // pred_fallthru
      _
    // Predicated region
    $region42: #{tpu_custom_call.1} parent=1 // pred_check
      _
    $region43: #{tpu_custom_call.1} parent=1 // pred_check_branch
      %80 = sbr.rel (0) target = $region45
    $region44: #{tpu_custom_call.1} parent=1 // pred_region
      %81 = dma.done [#allocation9], 1024
    $region45: #{tpu_custom_call.1} parent=1 // pred_fallthru
      _
    %v83 = vld [vmem:[#allocation2] sm:$0xf]
    %v84 = vld [vmem:[#allocation2 + $0x4] sm:$0xf]
    %v85 = vld [vmem:[#allocation5] sm:$0xf]
    %v86 = vld [vmem:[#allocation5 + $0x4] sm:$0xf]
    %v87 = vld [vmem:[#allocation5 + $0x8] sm:$0xf]
    %v88 = vld [vmem:[#allocation5 + $0xc] sm:$0xf]
    %v89 = vld [vmem:[#allocation5 + $0x10] sm:$0xf]
    %v90 = vld [vmem:[#allocation5 + $0x14] sm:$0xf]
    %v91 = vld [vmem:[#allocation5 + $0x18] sm:$0xf]
    %v92 = vld [vmem:[#allocation5 + $0x1c] sm:$0xf]
    %v93 = vld [vmem:[#allocation5 + $0x20] sm:$0xf]
    %v94 = vld [vmem:[#allocation5 + $0x24] sm:$0xf]
    %v95 = vld [vmem:[#allocation5 + $0x28] sm:$0xf]
    %v96 = vld [vmem:[#allocation5 + $0x2c] sm:$0xf]
    %v97 = vld [vmem:[#allocation5 + $0x30] sm:$0xf]
    %v98 = vld [vmem:[#allocation5 + $0x34] sm:$0xf]
    %v99 = vld [vmem:[#allocation5 + $0x38] sm:$0xf]
    %v100 = vld [vmem:[#allocation5 + $0x3c] sm:$0xf]
    %v103 = vunpack.c.l.b16 %v83
    %v104 = vunpack.c.l.b16 %v84
    %v105 = vpack.c.b16 %v104, %v103
    %v123 = vunpack.c.l.b16 %v85
    %v124 = vunpack.c.l.b16 %v86
    %v125 = vunpack.c.l.b16 %v87
    %v126 = vunpack.c.l.b16 %v88
    %v127 = vunpack.c.l.b16 %v89
    %v128 = vunpack.c.l.b16 %v90
    %v129 = vunpack.c.l.b16 %v91
    %v130 = vunpack.c.l.b16 %v92
    %v131 = vunpack.c.l.b16 %v93
    %v132 = vunpack.c.l.b16 %v94
    %v133 = vunpack.c.l.b16 %v95
    %v134 = vunpack.c.l.b16 %v96
    %v135 = vunpack.c.l.b16 %v97
    %v136 = vunpack.c.l.b16 %v98
    %v137 = vunpack.c.l.b16 %v99
    %v138 = vunpack.c.l.b16 %v100
    %v139 = vpack.c.b16 %v124, %v123
    %v140 = vpack.c.b16 %v126, %v125
    %v141 = vpack.c.b16 %v128, %v127
    %v142 = vpack.c.b16 %v130, %v129
    %v143 = vpack.c.b16 %v132, %v131
    %v144 = vpack.c.b16 %v134, %v133
    %v145 = vpack.c.b16 %v136, %v135
    %v146 = vpack.c.b16 %v138, %v137
    %155 = vmatprep.subr.bf16.mxu0 0
    %156 = vmatpush1.bf16.msra.mxu0 %v146
    %157 = vmatprep.subr.bf16.mxu0 0
    %158 = vmatpush1.bf16.msra.mxu0 %v145
    %159 = vmatprep.subr.bf16.mxu0 0
    %160 = vmatpush1.bf16.msra.mxu0 %v144
    %161 = vmatprep.subr.bf16.mxu0 0
    %162 = vmatpush1.bf16.msra.mxu0 %v143
    %163 = vmatprep.subr.bf16.mxu0 0
    %164 = vmatpush1.bf16.msra.mxu0 %v142
    %165 = vmatprep.subr.bf16.mxu0 0
    %166 = vmatpush1.bf16.msra.mxu0 %v141
    %167 = vmatprep.subr.bf16.mxu0 0
    %168 = vmatpush1.bf16.msra.mxu0 %v140
    %169 = vmatprep.subr.bf16.mxu0 0
    %170 = vmatpush1.bf16.msra.mxu0 %v139
    %171 = vmatprep.subr.bf16.mxu0 0
    %172 = vmatpush2.bf16.msra.mxu0 0
    %173 = vmatprep.subr.bf16.mxu0 0
    %174 = vmatpush2.bf16.msra.mxu0 0
    %175 = vmatprep.subr.bf16.mxu0 0
    %176 = vmatpush2.bf16.msra.mxu0 0
    %177 = vmatprep.subr.bf16.mxu0 0
    %178 = vmatpush2.bf16.msra.mxu0 0
    %179 = vmatprep.subr.bf16.mxu0 0
    %180 = vmatpush2.bf16.msra.mxu0 0
    %181 = vmatprep.subr.bf16.mxu0 0
    %182 = vmatpush2.bf16.msra.mxu0 0
    %183 = vmatprep.subr.bf16.mxu0 0
    %184 = vmatpush2.bf16.msra.mxu0 0
    %185 = vmatprep.subr.bf16.mxu0 0
    %186 = vmatpush2.bf16.msra.mxu0 0
    %187 = vmatprep.mubr.bf16.mxu0 0
    %188 = vmatmul.mubr.bf16.gmra.mxu0 %v105
    %v189 = vpop.f32.mrf.mxu0
    %v190 = vadd.f32 0.0, %v189
    %v191 = vpop.f32.mrf.mxu0
    %v192 = vpop.f32.mrf.mxu0
    %v193 = vadd.f32 0.0, %v192
    %v194 = vpop.f32.mrf.mxu0
    %195 = vdwg.mxu0
    %v196 = vpack.c.bf16 %v193, %v190
    %v197 = vld [vmem:[%s2] sm:$0x1]
    %v198 = vpack.c.bf16 %v197, %v197
    %v200 = vpack.i.b16 %v198, %v198
    %v202 = vlaneseq
    %v203 = vshrl.u32 %v202, 7
    %v204 = vsub.s32 0, %v203
    %v205 = vrot.slane %v200, %v204
    %v206 = vadd.bf16 %v196, %v205
    %v207 = vmax.bf16 %v206, 0
    %v208 = vld [vmem:[#allocation7] sm:$0xf]
    %v209 = vld [vmem:[#allocation7 + $0x4] sm:$0xf]
    %v210 = vld [vmem:[#allocation7 + $0x8] sm:$0xf]
    %v211 = vld [vmem:[#allocation7 + $0xc] sm:$0xf]
    %v212 = vld [vmem:[#allocation7 + $0x10] sm:$0xf]
    %v213 = vld [vmem:[#allocation7 + $0x14] sm:$0xf]
    %v214 = vld [vmem:[#allocation7 + $0x18] sm:$0xf]
    %v215 = vld [vmem:[#allocation7 + $0x1c] sm:$0xf]
    %v216 = vld [vmem:[#allocation7 + $0x20] sm:$0xf]
    %v217 = vld [vmem:[#allocation7 + $0x24] sm:$0xf]
    %v218 = vld [vmem:[#allocation7 + $0x28] sm:$0xf]
    %v219 = vld [vmem:[#allocation7 + $0x2c] sm:$0xf]
    %v220 = vld [vmem:[#allocation7 + $0x30] sm:$0xf]
    %v221 = vld [vmem:[#allocation7 + $0x34] sm:$0xf]
    %v222 = vld [vmem:[#allocation7 + $0x38] sm:$0xf]
    %v223 = vld [vmem:[#allocation7 + $0x3c] sm:$0xf]
    %v240 = vunpack.c.l.b16 %v208
    %v241 = vunpack.c.l.b16 %v209
    %v242 = vunpack.c.l.b16 %v210
    %v243 = vunpack.c.l.b16 %v211
    %v244 = vunpack.c.l.b16 %v212
    %v245 = vunpack.c.l.b16 %v213
    %v246 = vunpack.c.l.b16 %v214
    %v247 = vunpack.c.l.b16 %v215
    %v248 = vunpack.c.l.b16 %v216
    %v249 = vunpack.c.l.b16 %v217
    %v250 = vunpack.c.l.b16 %v218
    %v251 = vunpack.c.l.b16 %v219
    %v252 = vunpack.c.l.b16 %v220
    %v253 = vunpack.c.l.b16 %v221
    %v254 = vunpack.c.l.b16 %v222
    %v255 = vunpack.c.l.b16 %v223
    %v256 = vpack.c.b16 %v241, %v240
    %v257 = vpack.c.b16 %v243, %v242
    %v258 = vpack.c.b16 %v245, %v244
    %v259 = vpack.c.b16 %v247, %v246
    %v260 = vpack.c.b16 %v249, %v248
    %v261 = vpack.c.b16 %v251, %v250
    %v262 = vpack.c.b16 %v253, %v252
    %v263 = vpack.c.b16 %v255, %v254
    %272 = vmatprep.subr.bf16.mxu0 0
    %273 = vmatpush1.bf16.msra.mxu0 %v263
    %274 = vmatprep.subr.bf16.mxu0 0
    %275 = vmatpush1.bf16.msra.mxu0 %v262
    %276 = vmatprep.subr.bf16.mxu0 0
    %277 = vmatpush1.bf16.msra.mxu0 %v261
    %278 = vmatprep.subr.bf16.mxu0 0
    %279 = vmatpush1.bf16.msra.mxu0 %v260
    %280 = vmatprep.subr.bf16.mxu0 0
    %281 = vmatpush1.bf16.msra.mxu0 %v259
    %282 = vmatprep.subr.bf16.mxu0 0
    %283 = vmatpush1.bf16.msra.mxu0 %v258
    %284 = vmatprep.subr.bf16.mxu0 0
    %285 = vmatpush1.bf16.msra.mxu0 %v257
    %286 = vmatprep.subr.bf16.mxu0 0
    %287 = vmatpush1.bf16.msra.mxu0 %v256
    %288 = vmatprep.subr.bf16.mxu0 0
    %289 = vmatpush2.bf16.msra.mxu0 0
    %290 = vmatprep.subr.bf16.mxu0 0
    %291 = vmatpush2.bf16.msra.mxu0 0
    %292 = vmatprep.subr.bf16.mxu0 0
    %293 = vmatpush2.bf16.msra.mxu0 0
    %294 = vmatprep.subr.bf16.mxu0 0
    %295 = vmatpush2.bf16.msra.mxu0 0
    %296 = vmatprep.subr.bf16.mxu0 0
    %297 = vmatpush2.bf16.msra.mxu0 0
    %298 = vmatprep.subr.bf16.mxu0 0
    %299 = vmatpush2.bf16.msra.mxu0 0
    %300 = vmatprep.subr.bf16.mxu0 0
    %301 = vmatpush2.bf16.msra.mxu0 0
    %302 = vmatprep.subr.bf16.mxu0 0
    %303 = vmatpush2.bf16.msra.mxu0 0
    %304 = vmatprep.mubr.bf16.mxu0 0
    %305 = vmatmul.mubr.bf16.gmra.mxu0 %v207
    %v306 = vpop.f32.mrf.mxu0
    %v307 = vadd.f32 0.0, %v306
    %v308 = vpop.f32.mrf.mxu0
    %v309 = vpop.f32.mrf.mxu0
    %v310 = vadd.f32 0.0, %v309
    %v311 = vpop.f32.mrf.mxu0
    %312 = vdwg.mxu0
    %v313 = vpack.c.bf16 %v310, %v307
    %v314 = vld [vmem:[%s4] sm:$0x1]
    %v315 = vpack.c.bf16 %v314, %v314
    %v317 = vpack.i.b16 %v315, %v315
    %v319 = vlaneseq
    %v320 = vshrl.u32 %v319, 7
    %v321 = vsub.s32 0, %v320
    %v322 = vrot.slane %v317, %v321
    %v323 = vadd.bf16 %v313, %v322
    %v324 = vmax.bf16 %v323, 0
    %v325 = vld [vmem:[#allocation8] sm:$0xf]
    %v326 = vld [vmem:[#allocation8 + $0x4] sm:$0xf]
    %v327 = vld [vmem:[#allocation8 + $0x8] sm:$0xf]
    %v328 = vld [vmem:[#allocation8 + $0xc] sm:$0xf]
    %v329 = vld [vmem:[#allocation8 + $0x10] sm:$0xf]
    %v330 = vld [vmem:[#allocation8 + $0x14] sm:$0xf]
    %v331 = vld [vmem:[#allocation8 + $0x18] sm:$0xf]
    %v332 = vld [vmem:[#allocation8 + $0x1c] sm:$0xf]
    %v333 = vld [vmem:[#allocation8 + $0x20] sm:$0xf]
    %v334 = vld [vmem:[#allocation8 + $0x24] sm:$0xf]
    %v335 = vld [vmem:[#allocation8 + $0x28] sm:$0xf]
    %v336 = vld [vmem:[#allocation8 + $0x2c] sm:$0xf]
    %v337 = vld [vmem:[#allocation8 + $0x30] sm:$0xf]
    %v338 = vld [vmem:[#allocation8 + $0x34] sm:$0xf]
    %v339 = vld [vmem:[#allocation8 + $0x38] sm:$0xf]
    %v340 = vld [vmem:[#allocation8 + $0x3c] sm:$0xf]
    %v341 = vld [vmem:[%s6] sm:$0x1]
    %v343 = vlaneseq
    %v344 = vshrl.u32 %v343, 7
    %v345 = vsub.s32 0, %v344
    %v346 = vrot.slane %v341, %v345
    %v364 = vunpack.c.l.b16 %v325
    %v365 = vunpack.c.l.b16 %v326
    %v366 = vunpack.c.l.b16 %v327
    %v367 = vunpack.c.l.b16 %v328
    %v368 = vunpack.c.l.b16 %v329
    %v369 = vunpack.c.l.b16 %v330
    %v370 = vunpack.c.l.b16 %v331
    %v371 = vunpack.c.l.b16 %v332
    %v372 = vunpack.c.l.b16 %v333
    %v373 = vunpack.c.l.b16 %v334
    %v374 = vunpack.c.l.b16 %v335
    %v375 = vunpack.c.l.b16 %v336
    %v376 = vunpack.c.l.b16 %v337
    %v377 = vunpack.c.l.b16 %v338
    %v378 = vunpack.c.l.b16 %v339
    %v379 = vunpack.c.l.b16 %v340
    %v380 = vpack.c.b16 %v365, %v364
    %v381 = vpack.c.b16 %v367, %v366
    %v382 = vpack.c.b16 %v369, %v368
    %v383 = vpack.c.b16 %v371, %v370
    %v384 = vpack.c.b16 %v373, %v372
    %v385 = vpack.c.b16 %v375, %v374
    %v386 = vpack.c.b16 %v377, %v376
    %v387 = vpack.c.b16 %v379, %v378
    %396 = vmatprep.subr.bf16.mxu0 0
    %397 = vmatpush1.bf16.msra.mxu0 %v387
    %398 = vmatprep.subr.bf16.mxu0 0
    %399 = vmatpush1.bf16.msra.mxu0 %v386
    %400 = vmatprep.subr.bf16.mxu0 0
    %401 = vmatpush1.bf16.msra.mxu0 %v385
    %402 = vmatprep.subr.bf16.mxu0 0
    %403 = vmatpush1.bf16.msra.mxu0 %v384
    %404 = vmatprep.subr.bf16.mxu0 0
    %405 = vmatpush1.bf16.msra.mxu0 %v383
    %406 = vmatprep.subr.bf16.mxu0 0
    %407 = vmatpush1.bf16.msra.mxu0 %v382
    %408 = vmatprep.subr.bf16.mxu0 0
    %409 = vmatpush1.bf16.msra.mxu0 %v381
    %410 = vmatprep.subr.bf16.mxu0 0
    %411 = vmatpush1.bf16.msra.mxu0 %v380
    %412 = vmatprep.subr.bf16.mxu0 0
    %413 = vmatpush2.bf16.msra.mxu0 0
    %414 = vmatprep.subr.bf16.mxu0 0
    %415 = vmatpush2.bf16.msra.mxu0 0
    %416 = vmatprep.subr.bf16.mxu0 0
    %417 = vmatpush2.bf16.msra.mxu0 0
    %418 = vmatprep.subr.bf16.mxu0 0
    %419 = vmatpush2.bf16.msra.mxu0 0
    %420 = vmatprep.subr.bf16.mxu0 0
    %421 = vmatpush2.bf16.msra.mxu0 0
    %422 = vmatprep.subr.bf16.mxu0 0
    %423 = vmatpush2.bf16.msra.mxu0 0
    %424 = vmatprep.subr.bf16.mxu0 0
    %425 = vmatpush2.bf16.msra.mxu0 0
    %426 = vmatprep.subr.bf16.mxu0 0
    %427 = vmatpush2.bf16.msra.mxu0 0
    %428 = vmatprep.mubr.bf16.mxu0 0
    %429 = vmatmul.mubr.bf16.gmra.mxu0 %v324
    %v430 = vpop.f32.mrf.mxu0
    %v431 = vadd.f32 %v346, %v430
    %v432 = vpop.f32.mrf.mxu0
    %v433 = vpop.f32.mrf.mxu0
    %v434 = vadd.f32 %v346, %v433
    %v435 = vpop.f32.mrf.mxu0
    %436 = vdwg.mxu0
    %v437 = vpack.c.bf16 %v434, %v431
    %v439 = vunpack.c.l.b16 %v437
    %v440 = vunpack.c.h.b16 %v437
    %v441 = vpack.c.b16 %v439, %v439
    %v442 = vpack.c.b16 %v440, %v440
    %445 = vst [vmem:[#allocation10] sm:$0xf] %v441
    %446 = vst [vmem:[#allocation10 + $0x4] sm:$0xf] %v442
    // Predicated region
    $region46: #{tpu_custom_call.1} parent=1 // pred_check
      _
    $region47: #{tpu_custom_call.1} parent=1 // pred_check_branch
      %448 = sbr.rel (0) target = $region49
    $region48: #{tpu_custom_call.1} parent=1 // pred_region
      %s450 = ssub.s32 128, 128
      %451 = vsyncadd [#allocation4], %s450
      %s452 = sshll.u32 [#allocation10], 4
      %s453 = int_to_ptr.vmem [resolvable:$true] %s452
      %458 = dma.vmem_to_hbm [thread:$0]  %s453, 128, %s7, [#allocation4], 64, 64, 4
    $region49: #{tpu_custom_call.1} parent=1 // pred_fallthru
      _
    // Predicated region
    $region50: #{tpu_custom_call.1} parent=1 // pred_check
      _
    $region51: #{tpu_custom_call.1} parent=1 // pred_check_branch
      %460 = sbr.rel (0) target = $region53
    $region52: #{tpu_custom_call.1} parent=1 // pred_region
      %461 = dma.done [#allocation4], 128
    $region53: #{tpu_custom_call.1} parent=1 // pred_fallthru
      _
    %462 = vsyncpa [#allocation3], 1
    %463 = vsyncpa [#allocation6], 1
    %464 = vsyncpa [#allocation9], 1
    %465 = vsyncpa [#allocation4], 1

</llo_original>
